<compile_context>
chip_gen: v6e
topology: v6e:2x2x1
jax: 0.10.0
libtpu: 0.0.40
codegen_flags: <defaults>
</compile_context>

<pallas_src>
import functools
import math

import jax
import jax.numpy as jnp
from jax.experimental import pallas as pl
from jax.experimental.pallas import tpu as pltpu


def _mix32(x):
    """lowbias32 integer hash, uint32 -> uint32 (good avalanche, pure VPU ops)."""
    x = x ^ (x >> 16)
    x = x * jnp.uint32(0x7FEB352D)
    x = x ^ (x >> 15)
    x = x * jnp.uint32(0x846CA68B)
    x = x ^ (x >> 16)
    return x


def _posenc_kernel(seed_ref, x_ref, pe_ref, o_ref, *, p, training, batch):
    # x_ref/o_ref: (ts, B*D) lane-dense tiles; pe_ref: (ts, D).
    pe = pe_ref[...]
    if batch > 1:
        pe = jnp.tile(pe, (1, batch))          # broadcast over batch along lanes
    y = x_ref[...] + pe

    if training and p > 0.0:
        # Inverted dropout with a stateless counter-based hash RNG.
        # TODO(synk): torch.nn.Dropout's exact RNG stream cannot be reproduced;
        # this draws an equivalent Bernoulli(1-p) mask per element.
        ts, width = y.shape
        row = jax.lax.broadcasted_iota(jnp.int32, (ts, width), 0)
        col = jax.lax.broadcasted_iota(jnp.int32, (ts, width), 1)
        gidx = (pl.program_id(0) * ts + row) * width + col      # global element id
        salt = _mix32(seed_ref[0].astype(jnp.uint32) * jnp.uint32(0x9E3779B9)
                      + jnp.uint32(0x85EBCA6B))                 # non-additive seed mix
        bits = _mix32(gidx.astype(jnp.uint32) ^ salt)
        thresh = jnp.uint32(min(int(round(p * (2.0 ** 32))), 2 ** 32 - 1))
        keep = bits >= thresh                                    # P(keep) = 1 - p
        y = jnp.where(keep, y * (1.0 / (1.0 - p)), jnp.zeros_like(y))

    o_ref[...] = y.astype(o_ref.dtype)


def make_pe_table(d_model, max_len=5000, dtype=jnp.float32):
    """Sin/cos buffer of the PyTorch module, stored 2D as (max_len, d_model)."""
    position = jnp.arange(max_len, dtype=jnp.float32)[:, None]              # (L, 1)
    div_term = jnp.exp(jnp.arange(0, d_model, 2, dtype=jnp.float32)
                       * (-math.log(10000.0) / d_model))                    # (D/2,)
    angles = position * div_term                                            # (L, D/2)
    pe = jnp.zeros((max_len, d_model), jnp.float32)
    pe = pe.at[:, 0::2].set(jnp.sin(angles))
    pe = pe.at[:, 1::2].set(jnp.cos(angles))
    return pe.astype(dtype)


def positional_encoding(x, pe, *, p=0.1, training=False, seed=0,
                        target_tile_bytes=2 << 20):
    """Pallas forward of PositionalEncoding.

    x:  (seq, batch, d_model)
    pe: (max_len, d_model) from make_pe_table (a (max_len, 1, d_model) torch-style
        buffer is also accepted).  Build it in x.dtype once to avoid per-call casts.
    """
    S, B, D = x.shape
    if pe.ndim == 3:                      # torch buffer layout (max_len, 1, d_model)
        assert pe.shape[1] == 1
        pe = pe.reshape(pe.shape[0], pe.shape[2])
    assert pe.shape[0] >= S and pe.shape[1] == D
    if pe.dtype != x.dtype:               # avoid this path: build table in x.dtype
        pe = pe.astype(x.dtype)

    width = B * D
    x2 = x.reshape(S, width)              # contiguous, metadata-only reshape
    itemsize = x.dtype.itemsize
    sub = max(8, 32 // itemsize)          # sublane granularity: 8 f32 / 16 bf16 / 32 int8

    # Bytes-driven sequence tile: ~target_tile_bytes of x per grid step.
    ts_cand = max(sub, target_tile_bytes // (width * itemsize))
    if ts_cand >= S:
        # One tile covers everything; split into >=2 steps for v7x's 2 TCs when
        # there is enough work to be worth the per-step overhead.
        if S >= 2 * sub and S * width * itemsize >= (1 << 20):
            ts = ((pl.cdiv(S, 2) + sub - 1) // sub) * sub
        else:
            ts = S
    else:
        ts = max(sub, (ts_cand // sub) * sub)
    grid = (pl.cdiv(S, ts),)

    # pe's block second-to-last dim must be a multiple of 8 or equal its full
    # extent; only if ts is an odd (non-multiple-of-8) full-sequence tile do we
    # fall back to a host-side row slice.
    pe_in = pe if (ts % 8 == 0) else pe[:S]

    seed_arr = jnp.array([seed], dtype=jnp.int32)
    kernel = functools.partial(_posenc_kernel, p=float(p),
                               training=bool(training), batch=B)

    cost = pl.CostEstimate(
        flops=S * B * D,                                   # the broadcast add
        transcendentals=0,
        bytes_accessed=(2 * S * B * D + S * D) * itemsize)

    out2 = pl.pallas_call(
        kernel,
        out_shape=jax.ShapeDtypeStruct((S, width), x.dtype),
        grid_spec=pltpu.PrefetchScalarGridSpec(
            num_scalar_prefetch=1,                         # seed lands in SMEM
            grid=grid,
            in_specs=[
                pl.BlockSpec((ts, width), lambda i, seed: (i, 0)),   # x tile
                pl.BlockSpec((ts, D), lambda i, seed: (i, 0)),       # pe rows
            ],
            out_specs=pl.BlockSpec((ts, width), lambda i, seed: (i, 0)),
        ),
        compiler_params=pltpu.CompilerParams(
            dimension_semantics=("parallel",)),            # shards across v7x TCs
        cost_estimate=cost,
    )(seed_arr, x2, pe_in)

    return out2.reshape(S, B, D)


if __name__ == "__main__":
    # Small shapes consistent with the module: (seq, batch, d_model).
    SEQ, BS, D_MODEL, MAX_LEN = 8, 2, 128, 5000
    P_DROP = 0.1

    key = jax.random.PRNGKey(0)
    x = jax.random.normal(key, (SEQ, BS, D_MODEL), jnp.float32)
    pe = make_pe_table(D_MODEL, MAX_LEN, dtype=x.dtype)

    # Eval-mode forward (dropout == identity), matches module.eval().
    out = positional_encoding(x, pe, p=P_DROP, training=False)
    out = jax.block_until_ready(out)
    ref = x + pe[:SEQ][:, None, :]
    assert out.shape == x.shape
    assert jnp.allclose(out, ref, atol=1e-6, rtol=1e-6), "eval mismatch vs reference"

    # Training-mode forward exercises the fused in-kernel dropout path.
    out_tr = positional_encoding(x, pe, p=P_DROP, training=True, seed=123)
    out_tr = jax.block_until_ready(out_tr)
    assert out_tr.shape == x.shape
    assert bool(jnp.all(jnp.isfinite(out_tr)))
    # Every element is either exactly 0 (dropped) or (x + pe) / (1 - p) (kept).
    scaled = ref / (1.0 - P_DROP)
    ok = jnp.isclose(out_tr, scaled, atol=1e-5, rtol=1e-5) | (out_tr == 0.0)
    assert bool(jnp.all(ok)), "dropout scaling mismatch"
    drop_frac = float(jnp.mean((out_tr == 0.0).astype(jnp.float32)))
    assert 0.0 < drop_frac < 0.5, f"implausible drop fraction {drop_frac}"

    print("KERNEL_OK")
</pallas_src>

<mosaic_0001>
module attributes {stable_mosaic.version = 11 : i64} {
  func.func @_posenc_kernel(%arg0: i32, %arg1: memref<1xi32, #tpu.memory_space<smem>>, %arg2: memref<8x256xf32, #tpu.memory_space<vmem>>, %arg3: memref<8x128xf32, #tpu.memory_space<vmem>>, %arg4: memref<8x256xf32, #tpu.memory_space<vmem>>) attributes {dimension_semantics = [#tpu.dimension_semantics<parallel>], iteration_bounds = array<i64: 1>, scalar_prefetch = 1 : i64, scratch_operands = 0 : i64, tpu.core_type = #tpu.core_type<tc>, window_params = [{transform_indices = @transform_0, window_bounds = array<i64: 8, 256>}, {transform_indices = @transform_1, window_bounds = array<i64: 8, 128>}, {transform_indices = @transform_2, window_bounds = array<i64: 8, 256>}]} {
    %c0 = arith.constant 0 : index
    %c0_0 = arith.constant 0 : index
    %0 = vector.load %arg3[%c0, %c0_0] : memref<8x128xf32, #tpu.memory_space<vmem>>, vector<8x128xf32>
    %1 = tpu.concatenate %0, %0 in 1 : vector<8x128xf32>, vector<8x128xf32> -> vector<8x256xf32>
    %c0_1 = arith.constant 0 : index
    %c0_2 = arith.constant 0 : index
    %2 = vector.load %arg2[%c0_1, %c0_2] : memref<8x256xf32, #tpu.memory_space<vmem>>, vector<8x256xf32>
    %3 = arith.addf %2, %1 : vector<8x256xf32>
    %c0_3 = arith.constant 0 : index
    %c0_4 = arith.constant 0 : index
    %4 = vector.load %arg4[%c0_3, %c0_4] : memref<8x256xf32, #tpu.memory_space<vmem>>, vector<8x256xf32>
    tpu.vector_store %arg4[%c0_3, %c0_4], %3 {strides = array<i32>} : memref<8x256xf32, #tpu.memory_space<vmem>>, vector<8x256xf32>,
    return
  }
  func.func @transform_0(%arg0: i32, %arg1: memref<1xi32, #tpu.memory_space<smem>>) -> (i32, i32) {
    %c0_i32 = arith.constant 0 : i32
    %c0_i32_0 = arith.constant 0 : i32
    return %arg0, %c0_i32 : i32, i32
  }
  func.func @transform_1(%arg0: i32, %arg1: memref<1xi32, #tpu.memory_space<smem>>) -> (i32, i32) {
    %c0_i32 = arith.constant 0 : i32
    %c0_i32_0 = arith.constant 0 : i32
    return %arg0, %c0_i32 : i32, i32
  }
  func.func @transform_2(%arg0: i32, %arg1: memref<1xi32, #tpu.memory_space<smem>>) -> (i32, i32) {
    %c0_i32 = arith.constant 0 : i32
    %c0_i32_0 = arith.constant 0 : i32
    return %arg0, %c0_i32 : i32, i32
  }
}

</mosaic_0001>

<llo_original>
// kernel: tpu_custom_call.1
$region0: #{tpu_custom_call.1}
  #allocation0 [shape = 'u32[]', space=smem, size = 0x4, offset = 0x4, fixed_abs, tag = 'smem constant byte address 0x4 - core index']
  #allocation1 [shape = 'u32[144,128]{1,0:T(1,128)}', space=vmem, size = 0x12000, scoped, tag = 'internal scratch']
  #allocation2 [shape = 's32[1]{0}', space=sflag, size = 0x4, scoped, tag = 'scoped memory for tpu_custom_call.1']
  #allocation3 [shape = 's32[1]{0:T(128)S(6)}', space=smem, size = 0x200, scoped, tag = 'prefetched SMEM operand 0']
  %s0 = inlined_call_operand.<no memory space> [shape: s32[1], index: 0, kind: input, shape index: {}]
  %s1 = inlined_call_operand.hbm [shape: f32[8,256], index: 1, kind: input, shape index: {}]
  %s2 = inlined_call_operand.hbm [shape: f32[5000,128], index: 2, kind: input, shape index: {}]
  %s3 = inlined_call_operand.hbm [shape: f32[8,256], index: 3, kind: output, shape index: {}]
  %s4 = sld [smem:[#allocation0]]
  $region26: #{tpu_custom_call.1} parent=0
    _
  %s6 = ssub.s32 1, %s4
  %s7 = scalar_select 0, %s6, %s4
  %8 = sst [smem:[#allocation3]] %s0
  $region1: #{tpu_custom_call.1} parent=0
    #allocation4 [shape = 'u8[8192]{0}', space=vmem, size = 0x2000, scoped, tag = 'input window, operand 1, single buffered']
    #allocation5 [shape = 's32[1]{0}', space=sflag, size = 0x4, scoped, tag = 'scoped memory for tpu_custom_call.1']
    #allocation6 [shape = 's32[1]{0}', space=sflag, size = 0x4, scoped, tag = 'scoped memory for tpu_custom_call.1']
    #allocation7 [shape = 'u8[4096]{0}', space=vmem, size = 0x1000, scoped, tag = 'input window, operand 2, single buffered']
    #allocation8 [shape = 's32[1]{0}', space=sflag, size = 0x4, scoped, tag = 'scoped memory for tpu_custom_call.1']
    #allocation9 [shape = 'u8[8192]{0}', space=vmem, size = 0x2000, scoped, tag = 'output window, operand 0, single buffered']
    %9 = vsyncpa [#allocation5], 0
    %10 = vsyncpa [#allocation8], 0
    %11 = vsyncpa [#allocation6], 0
    // Predicated region
    $region2: #{tpu_custom_call.1} parent=1 // pred_check
      _
    $region3: #{tpu_custom_call.1} parent=1 // pred_check_branch
      %13 = sbr.rel (0) target = $region5
    $region4: #{tpu_custom_call.1} parent=1 // pred_region
      %s15 = ssub.s32 256, 256
      %16 = vsyncadd [#allocation5], %s15
      %s18 = sshll.u32 [#allocation4], 4
      %s19 = int_to_ptr.vmem [resolvable:$true] %s18
      %21 = dma.hbm_to_vmem [thread:$0]  %s1, 256, %s19, [#allocation5]
    $region5: #{tpu_custom_call.1} parent=1 // pred_fallthru
      _
    // Predicated region
    $region6: #{tpu_custom_call.1} parent=1 // pred_check
      _
    $region7: #{tpu_custom_call.1} parent=1 // pred_check_branch
      %23 = sbr.rel (0) target = $region9
    $region8: #{tpu_custom_call.1} parent=1 // pred_region
      %s25 = ssub.s32 128, 128
      %26 = vsyncadd [#allocation8], %s25
      %s28 = sshll.u32 [#allocation7], 4
      %s29 = int_to_ptr.vmem [resolvable:$true] %s28
      %31 = dma.hbm_to_vmem [thread:$0]  %s2, 128, %s29, [#allocation8]
    $region9: #{tpu_custom_call.1} parent=1 // pred_fallthru
      _
    // Predicated region
    $region10: #{tpu_custom_call.1} parent=1 // pred_check
      _
    $region11: #{tpu_custom_call.1} parent=1 // pred_check_branch
      %33 = sbr.rel (0) target = $region13
    $region12: #{tpu_custom_call.1} parent=1 // pred_region
      %34 = dma.done [#allocation5], 256
    $region13: #{tpu_custom_call.1} parent=1 // pred_fallthru
      _
    // Predicated region
    $region14: #{tpu_custom_call.1} parent=1 // pred_check
      _
    $region15: #{tpu_custom_call.1} parent=1 // pred_check_branch
      %36 = sbr.rel (0) target = $region17
    $region16: #{tpu_custom_call.1} parent=1 // pred_region
      %37 = dma.done [#allocation8], 128
    $region17: #{tpu_custom_call.1} parent=1 // pred_fallthru
      _
    %v38 = vld [vmem:[#allocation7] sm:$0xff]
    %v39 = vld [vmem:[#allocation4] sm:$0xff]
    %v40 = vld [vmem:[#allocation4 + $0x8] sm:$0xff]
    %v41 = vadd.f32 %v39, %v38
    %v42 = vadd.f32 %v40, %v38
    %43 = vst [vmem:[#allocation9] sm:$0xff] %v41
    %44 = vst [vmem:[#allocation9 + $0x8] sm:$0xff] %v42
    // Predicated region
    $region18: #{tpu_custom_call.1} parent=1 // pred_check
      _
    $region19: #{tpu_custom_call.1} parent=1 // pred_check_branch
      %46 = sbr.rel (0) target = $region21
    $region20: #{tpu_custom_call.1} parent=1 // pred_region
      %s48 = ssub.s32 256, 256
      %49 = vsyncadd [#allocation6], %s48
      %s51 = sshll.u32 [#allocation9], 4
      %s52 = int_to_ptr.vmem [resolvable:$true] %s51
      %54 = dma.vmem_to_hbm [thread:$0]  %s52, 256, %s3, [#allocation6]
    $region21: #{tpu_custom_call.1} parent=1 // pred_fallthru
      _
    // Predicated region
    $region22: #{tpu_custom_call.1} parent=1 // pred_check
      _
    $region23: #{tpu_custom_call.1} parent=1 // pred_check_branch
      %56 = sbr.rel (0) target = $region25
    $region24: #{tpu_custom_call.1} parent=1 // pred_region
      %57 = dma.done [#allocation6], 256
    $region25: #{tpu_custom_call.1} parent=1 // pred_fallthru
      _
    %58 = vsyncpa [#allocation5], 1
    %59 = vsyncpa [#allocation8], 1
    %60 = vsyncpa [#allocation6], 1

</llo_original>
